<compile_context>
chip_gen: v7x
topology: tpu7x:2x2x1
jax: 0.10.0
libtpu: 0.0.40
codegen_flags: <defaults>
</compile_context>

<pallas_src>
import functools

import jax
import jax.numpy as jnp
from jax.experimental import pallas as pl
from jax.experimental.pallas import tpu as pltpu

LANE = 128


def mlp_kernel(x_ref, w1_ref, w2_ref, w3_ref, w4_ref, b_ref, o_ref, *, d1, d2, d3):
    """Fused 4-layer MLP on one batch tile.

    x_ref : [tm, F]  f32   (cast to bf16 in-kernel for the MXU)
    w1_ref: [F, d1]  bf16, w2_ref: [d1, d2] bf16, w3_ref: [d2, d3] bf16
    w4_ref: [1, d3]  f32   (real out dim is 1 -> VPU mul + lane reduce, no MXU)
    b_ref : [4, dmax] f32  (rows 0..2 = layer biases, element [3,0] = output bias)
    o_ref : [tm, 1]  f32
    """
    x = x_ref[...].astype(jnp.bfloat16)                                  # [tm, F]

    h = jnp.dot(x, w1_ref[...], preferred_element_type=jnp.float32)      # [tm, d1] f32
    h = jnp.maximum(h + b_ref[0:1, :d1], 0.0)

    h = jnp.dot(h.astype(jnp.bfloat16), w2_ref[...],
                preferred_element_type=jnp.float32)                      # [tm, d2]
    h = jnp.maximum(h + b_ref[1:2, :d2], 0.0)

    h = jnp.dot(h.astype(jnp.bfloat16), w3_ref[...],
                preferred_element_type=jnp.float32)                      # [tm, d3]
    h = jnp.maximum(h + b_ref[2:3, :d3], 0.0)

    # Final layer (d3 real width is tiny, output width is 1): VPU multiply against the
    # f32 weight row + XLU lane-reduce; zero-padded lanes of h and w4 are inert.
    z = jnp.sum(h * w4_ref[...], axis=-1, keepdims=True) + b_ref[3:4, 0:1]  # [tm, 1]
    o_ref[...] = jax.nn.sigmoid(z).astype(o_ref.dtype)


def _round_up(n, m=LANE):
    return ((n + m - 1) // m) * m


def _pad2(a, rows, cols):
    return jnp.pad(a, ((0, rows - a.shape[0]), (0, cols - a.shape[1])))


def _choose_tm(B):
    # Prefer >= 4 grid steps (>= 2 per TensorCore on v7x) with the largest tile <= 128;
    # fall back to >= 2 steps, then to a single step for tiny batches.
    for want in (4, 2):
        for cand in (128, 64, 32, 16, 8):
            if B % cand == 0 and B // cand >= want:
                return cand
    return B


def prepare_params(params):
    """One-time padding / dtype prep (hoisted out of the forward path).

    params: list of (W[in, out] f32, b[1, out] f32) as in the PyTorch module
            (W already transposed to [in, out]).
    """
    (w1, b1), (w2, b2), (w3, b3), (w4, b4) = params
    F = w1.shape[0]
    d1, d2, d3 = (_round_up(w.shape[1]) for w in (w1, w2, w3))
    dmax = max(d1, d2, d3, LANE)

    w1p = _pad2(w1, F, d1).astype(jnp.bfloat16)       # [F,  d1]
    w2p = _pad2(w2, d1, d2).astype(jnp.bfloat16)      # [d1, d2]
    w3p = _pad2(w3, d2, d3).astype(jnp.bfloat16)      # [d2, d3]
    w4row = _pad2(w4.T, 1, d3).astype(jnp.float32)    # [1,  d3]  (kept f32 for VPU path)

    biases = jnp.zeros((4, dmax), jnp.float32)
    biases = biases.at[0, :b1.shape[1]].set(b1[0])
    biases = biases.at[1, :b2.shape[1]].set(b2[0])
    biases = biases.at[2, :b3.shape[1]].set(b3[0])
    biases = biases.at[3, 0].set(b4[0, 0])

    return (w1p, w2p, w3p, w4row, biases, (F, d1, d2, d3))


def mlp_forward(x, prepped, *, tm=None):
    """x: [B, F] float32. prepped: output of prepare_params. Returns [B, 1] float32."""
    w1p, w2p, w3p, w4row, biases, (F, d1, d2, d3) = prepped
    B, Fx = x.shape
    assert Fx == F, "feature dim mismatch with prepared params"
    tm = _choose_tm(B) if tm is None else tm
    assert B % tm == 0, "batch must be a multiple of the batch tile"

    kernel = functools.partial(mlp_kernel, d1=d1, d2=d2, d3=d3)

    def full(arr):  # fully-resident operand (constant block index)
        return pl.BlockSpec(arr.shape, lambda i: (0, 0))

    return pl.pallas_call(
        kernel,
        out_shape=jax.ShapeDtypeStruct((B, 1), jnp.float32),
        grid_spec=pltpu.PrefetchScalarGridSpec(
            num_scalar_prefetch=0,
            grid=(B // tm,),
            in_specs=[
                pl.BlockSpec((tm, F), lambda i: (i, 0)),   # x batch tile (unpadded K)
                full(w1p), full(w2p), full(w3p), full(w4row), full(biases),
            ],
            out_specs=pl.BlockSpec((tm, 1), lambda i: (i, 0)),
        ),
        compiler_params=pltpu.CompilerParams(
            dimension_semantics=("parallel",)),
    )(x, w1p, w2p, w3p, w4row, biases)


def init_linear(key, fan_in, fan_out):
    """Deterministic PyTorch-style Linear init; returns (W[in,out], b[1,out]) in f32."""
    kw, kb = jax.random.split(key)
    bound = 1.0 / jnp.sqrt(fan_in)
    # PyTorch stores W as [out, in]; keep it transposed to [in, out] for x @ W.
    w = jax.random.uniform(kw, (fan_in, fan_out), jnp.float32, -bound, bound)
    b = jax.random.uniform(kb, (1, fan_out), jnp.float32, -bound, bound)
    return w, b


def reference_mlp(x, params):
    (w1, b1), (w2, b2), (w3, b3), (w4, b4) = params
    h = jnp.maximum(x @ w1 + b1, 0.0)
    h = jnp.maximum(h @ w2 + b2, 0.0)
    h = jnp.maximum(h @ w3 + b3, 0.0)
    return jax.nn.sigmoid(h @ w4 + b4)


# TODO(synk): accuracy_fn from the PyTorch module is a host-side metric, not part of the
# forward pass, so it is intentionally not implemented as a kernel.

if __name__ == "__main__":
    # Small shapes consistent with the module; batch big enough to exercise the
    # batch-tiled grid (tm=64 -> 4 grid steps on the "parallel" batch axis).
    feature, hidden1, hidden2, hidden3 = 32, 64, 64, 32
    batch = 256

    root = jax.random.PRNGKey(0)
    kx, k1, k2, k3, k4 = jax.random.split(root, 5)

    params = (
        init_linear(k1, feature, hidden1),
        init_linear(k2, hidden1, hidden2),
        init_linear(k3, hidden2, hidden3),
        init_linear(k4, hidden3, 1),
    )
    x = jax.random.normal(kx, (batch, feature), jnp.float32)

    prepped = jax.block_until_ready(prepare_params(params))   # one-time prep (hoisted)

    out = mlp_forward(x, prepped)
    out = jax.block_until_ready(out)

    ref = reference_mlp(x, params)
    assert out.shape == (batch, 1)
    # bf16 matmul operands (f32 accumulation / epilogue) loosen the tolerance vs pure f32.
    assert jnp.allclose(out, ref, atol=2e-2, rtol=2e-2), \
        f"max abs diff {float(jnp.max(jnp.abs(out - ref)))}"

    print("KERNEL_OK")
</pallas_src>

<mosaic_0001>
module attributes {stable_mosaic.version = 11 : i64} {
  func.func @mlp_kernel(%arg0: i32, %arg1: memref<64x32xf32, #tpu.memory_space<vmem>>, %arg2: memref<32x128xbf16, #tpu.memory_space<vmem>>, %arg3: memref<128x128xbf16, #tpu.memory_space<vmem>>, %arg4: memref<128x128xbf16, #tpu.memory_space<vmem>>, %arg5: memref<1x128xf32, #tpu.memory_space<vmem>>, %arg6: memref<4x128xf32, #tpu.memory_space<vmem>>, %arg7: memref<64x1xf32, #tpu.memory_space<vmem>>) attributes {dimension_semantics = [#tpu.dimension_semantics<parallel>], iteration_bounds = array<i64: 4>, scalar_prefetch = 0 : i64, scratch_operands = 0 : i64, tpu.core_type = #tpu.core_type<tc>, window_params = [{transform_indices = @transform_0, window_bounds = array<i64: 64, 32>}, {pipeline_mode = #tpu.pipeline_mode<synchronous>, transform_indices = @transform_1, window_bounds = array<i64: 32, 128>}, {pipeline_mode = #tpu.pipeline_mode<synchronous>, transform_indices = @transform_2, window_bounds = array<i64: 128, 128>}, {pipeline_mode = #tpu.pipeline_mode<synchronous>, transform_indices = @transform_3, window_bounds = array<i64: 128, 128>}, {pipeline_mode = #tpu.pipeline_mode<synchronous>, transform_indices = @transform_4, window_bounds = array<i64: 1, 128>}, {pipeline_mode = #tpu.pipeline_mode<synchronous>, transform_indices = @transform_5, window_bounds = array<i64: 4, 128>}, {transform_indices = @transform_6, window_bounds = array<i64: 64, 1>}]} {
    %c0 = arith.constant 0 : index
    %c0_0 = arith.constant 0 : index
    %0 = vector.load %arg1[%c0, %c0_0] : memref<64x32xf32, #tpu.memory_space<vmem>>, vector<64x32xf32>
    %1 = arith.truncf %0 : vector<64x32xf32> to vector<64x32xbf16>
    %c0_1 = arith.constant 0 : index
    %c0_2 = arith.constant 0 : index
    %2 = vector.load %arg2[%c0_1, %c0_2] : memref<32x128xbf16, #tpu.memory_space<vmem>>, vector<32x128xbf16>
    %cst = arith.constant dense<0.000000e+00> : vector<64x128xf32>
    %3 = tpu.matmul %1, %2, %cst {dimension_numbers = #tpu.dot_dimension_numbers<[1], [0], [0], [1], [0, 0, 1, 1], [], []>} : vector<64x32xbf16>, vector<32x128xbf16>, vector<64x128xf32> -> vector<64x128xf32>
    %c0_3 = arith.constant 0 : index
    %c0_4 = arith.constant 0 : index
    %4 = vector.load %arg6[%c0_3, %c0_4] : memref<4x128xf32, #tpu.memory_space<vmem>>, vector<1x128xf32>
    %5 = vector.broadcast %4 : vector<1x128xf32> to vector<64x128xf32>
    %6 = arith.addf %3, %5 : vector<64x128xf32>
    %cst_5 = arith.constant 0.000000e+00 : f32
    %7 = vector.broadcast %cst_5 : f32 to vector<64x128xf32>
    %8 = arith.maximumf %6, %7 : vector<64x128xf32>
    %9 = arith.truncf %8 : vector<64x128xf32> to vector<64x128xbf16>
    %c0_6 = arith.constant 0 : index
    %c0_7 = arith.constant 0 : index
    %10 = vector.load %arg3[%c0_6, %c0_7] : memref<128x128xbf16, #tpu.memory_space<vmem>>, vector<128x128xbf16>
    %cst_8 = arith.constant dense<0.000000e+00> : vector<64x128xf32>
    %11 = tpu.matmul %9, %10, %cst_8 {dimension_numbers = #tpu.dot_dimension_numbers<[1], [0], [0], [1], [0, 0, 1, 1], [], []>} : vector<64x128xbf16>, vector<128x128xbf16>, vector<64x128xf32> -> vector<64x128xf32>
    %c1 = arith.constant 1 : index
    %c0_9 = arith.constant 0 : index
    %12 = vector.load %arg6[%c1, %c0_9] : memref<4x128xf32, #tpu.memory_space<vmem>>, vector<1x128xf32>
    %13 = vector.broadcast %12 : vector<1x128xf32> to vector<64x128xf32>
    %14 = arith.addf %11, %13 : vector<64x128xf32>
    %cst_10 = arith.constant 0.000000e+00 : f32
    %15 = vector.broadcast %cst_10 : f32 to vector<64x128xf32>
    %16 = arith.maximumf %14, %15 : vector<64x128xf32>
    %17 = arith.truncf %16 : vector<64x128xf32> to vector<64x128xbf16>
    %c0_11 = arith.constant 0 : index
    %c0_12 = arith.constant 0 : index
    %18 = vector.load %arg4[%c0_11, %c0_12] : memref<128x128xbf16, #tpu.memory_space<vmem>>, vector<128x128xbf16>
    %cst_13 = arith.constant dense<0.000000e+00> : vector<64x128xf32>
    %19 = tpu.matmul %17, %18, %cst_13 {dimension_numbers = #tpu.dot_dimension_numbers<[1], [0], [0], [1], [0, 0, 1, 1], [], []>} : vector<64x128xbf16>, vector<128x128xbf16>, vector<64x128xf32> -> vector<64x128xf32>
    %c2 = arith.constant 2 : index
    %c0_14 = arith.constant 0 : index
    %20 = vector.load %arg6[%c2, %c0_14] : memref<4x128xf32, #tpu.memory_space<vmem>>, vector<1x128xf32>
    %21 = vector.broadcast %20 : vector<1x128xf32> to vector<64x128xf32>
    %22 = arith.addf %19, %21 : vector<64x128xf32>
    %cst_15 = arith.constant 0.000000e+00 : f32
    %23 = vector.broadcast %cst_15 : f32 to vector<64x128xf32>
    %24 = arith.maximumf %22, %23 : vector<64x128xf32>
    %c0_16 = arith.constant 0 : index
    %c0_17 = arith.constant 0 : index
    %25 = vector.load %arg5[%c0_16, %c0_17] : memref<1x128xf32, #tpu.memory_space<vmem>>, vector<1x128xf32>
    %26 = vector.broadcast %25 : vector<1x128xf32> to vector<64x128xf32>
    %27 = arith.mulf %24, %26 : vector<64x128xf32>
    %cst_18 = arith.constant dense<0.000000e+00> : vector<64xf32>
    %28 = vector.multi_reduction <add>, %27, %cst_18 [1] : vector<64x128xf32> to vector<64xf32>
    %29 = vector.shape_cast %28 : vector<64xf32> to vector<64x1xf32>
    %c3 = arith.constant 3 : index
    %c0_19 = arith.constant 0 : index
    %30 = vector.load %arg6[%c3, %c0_19] : memref<4x128xf32, #tpu.memory_space<vmem>>, vector<1x1xf32>
    %31 = vector.broadcast %30 : vector<1x1xf32> to vector<64x1xf32>
    %32 = arith.addf %29, %31 : vector<64x1xf32>
    %33 = arith.negf %32 : vector<64x1xf32>
    %34 = math.exp %33 : vector<64x1xf32>
    %cst_20 = arith.constant 1.000000e+00 : f32
    %35 = vector.broadcast %cst_20 : f32 to vector<64x1xf32>
    %36 = arith.addf %35, %34 : vector<64x1xf32>
    %37 = arith.divf %35, %36 : vector<64x1xf32>
    %c0_21 = arith.constant 0 : index
    %c0_22 = arith.constant 0 : index
    %38 = vector.load %arg7[%c0_21, %c0_22] : memref<64x1xf32, #tpu.memory_space<vmem>>, vector<64x1xf32>
    tpu.vector_store %arg7[%c0_21, %c0_22], %37 {strides = array<i32>} : memref<64x1xf32, #tpu.memory_space<vmem>>, vector<64x1xf32>,
    return
  }
  func.func @transform_0(%arg0: i32) -> (i32, i32) {
    %c0_i32 = arith.constant 0 : i32
    %c0_i32_0 = arith.constant 0 : i32
    return %arg0, %c0_i32 : i32, i32
  }
  func.func @transform_1(%arg0: i32) -> (i32, i32) {
    %c0_i32 = arith.constant 0 : i32
    %c0_i32_0 = arith.constant 0 : i32
    %c0_i32_1 = arith.constant 0 : i32
    return %c0_i32, %c0_i32_0 : i32, i32
  }
  func.func @transform_2(%arg0: i32) -> (i32, i32) {
    %c0_i32 = arith.constant 0 : i32
    %c0_i32_0 = arith.constant 0 : i32
    %c0_i32_1 = arith.constant 0 : i32
    return %c0_i32, %c0_i32_0 : i32, i32
  }
  func.func @transform_3(%arg0: i32) -> (i32, i32) {
    %c0_i32 = arith.constant 0 : i32
    %c0_i32_0 = arith.constant 0 : i32
    %c0_i32_1 = arith.constant 0 : i32
    return %c0_i32, %c0_i32_0 : i32, i32
  }
  func.func @transform_4(%arg0: i32) -> (i32, i32) {
    %c0_i32 = arith.constant 0 : i32
    %c0_i32_0 = arith.constant 0 : i32
    %c0_i32_1 = arith.constant 0 : i32
    return %c0_i32, %c0_i32_0 : i32, i32
  }
  func.func @transform_5(%arg0: i32) -> (i32, i32) {
    %c0_i32 = arith.constant 0 : i32
    %c0_i32_0 = arith.constant 0 : i32
    %c0_i32_1 = arith.constant 0 : i32
    return %c0_i32, %c0_i32_0 : i32, i32
  }
  func.func @transform_6(%arg0: i32) -> (i32, i32) {
    %c0_i32 = arith.constant 0 : i32
    %c0_i32_0 = arith.constant 0 : i32
    return %arg0, %c0_i32 : i32, i32
  }
}

</mosaic_0001>

<llo_original>
// kernel: tpu_custom_call.1
$region0: #{tpu_custom_call.1}
  #allocation0 [shape = 'u32[]', space=smem, size = 0x4, offset = 0x4, fixed_abs, tag = 'smem constant byte address 0x4 - core index']
  #allocation1 [shape = 'u32[144,128]{1,0:T(1,128)}', space=vmem, size = 0x12000, scoped, tag = 'internal scratch']
  %s0 = inlined_call_operand.vmem [shape: f32[256,32], index: 0, kind: input, shape index: {}]
  %s1 = inlined_call_operand.vmem [shape: bf16[32,128], index: 1, kind: input, shape index: {}]
  %s2 = inlined_call_operand.vmem [shape: bf16[128,128], index: 2, kind: input, shape index: {}]
  %s3 = inlined_call_operand.vmem [shape: bf16[128,128], index: 3, kind: input, shape index: {}]
  %s4 = inlined_call_operand.vmem [shape: f32[1,128], index: 4, kind: input, shape index: {}]
  %s5 = inlined_call_operand.vmem [shape: f32[4,128], index: 5, kind: input, shape index: {}]
  %s6 = inlined_call_operand.vmem [shape: f32[256,1], index: 6, kind: output, shape index: {}]
  %s7 = sld [smem:[#allocation0]]
  $region57: #{tpu_custom_call.1} parent=0
    _
  %s9 = ssub.s32 1, %s7
  %s10 = scalar_select 0, %s9, %s7
  loop: start=0, step=1, limit=6
  $region2: #{tpu_custom_call.1} parent=0 // loop_pre_header
    _
  $region3: #{tpu_custom_call.1} parent=0 // loop_header
    %s12 = sphi 0, %s16
    %p13 = scmp.ge.s32.totalorder %s12, 6
    %s22 = sphi 0, %s24
    %s25 = sphi 0, %s22
    %s26 = sphi 0, %s25
    %s42 = sphi 0, %s26
    %s46 = sphi 0, %s46
    %s48 = sphi 0, %s46
    %s49 = sphi 0, %s48
    %s63 = sphi 0, %s49
    %s67 = sphi 0, %s67
    %s69 = sphi 0, %s67
    %s70 = sphi 0, %s69
    %s84 = sphi 0, %s70
    %s88 = sphi 0, %s88
    %s90 = sphi 0, %s88
    %s91 = sphi 0, %s90
    %s105 = sphi 0, %s91
    %s109 = sphi 0, %s109
    %s111 = sphi 0, %s109
    %s112 = sphi 0, %s111
    %s126 = sphi 0, %s112
    %s130 = sphi 0, %s130
    %s132 = sphi 0, %s130
    %s133 = sphi 0, %s132
    %s147 = sphi 0, %s133
    %s153 = sphi 0, %s155
    %s156 = sphi 0, %s153
    %s157 = sphi 0, %s156
    %s173 = sphi 0, %s157
  $region4: #{tpu_custom_call.1} parent=0 // loop_header_branch
    %15 = sbr.rel (%p13) target = $region8
  $region5: #{tpu_custom_call.1} parent=0 // loop_body
    %s17 = ssub.s32 %s12, 1
    %s18 = ssub.s32 %s12, 2
    %s19 = sadd.s32 %s12, 1
    %s20 = ssub.s32 %s12, %s19
    %p21 = scmp.eq.s32.totalorder %s20, 0
    %s23 = sadd.s32 %s22, 1
    %s24 = scalar_select %p21, %s22, %s23
    %p27 = pneg %p21
    %p28 = scmp.eq.s32.totalorder %s12, 3
    %p29 = por %p27, %p28
    %p30 = scmp.ne.s32.totalorder %s22, %s25
    %p31 = scmp.eq.s32.totalorder %s12, 0
    %p32 = por %p30, %p31
    %p33 = scmp.ne.s32.totalorder %s22, %s25
    %p34 = scmp.eq.s32.totalorder %s17, 3
    %p35 = por %p33, %p34
    %p36 = scmp.ne.s32.totalorder %s25, %s26
    %p37 = scmp.eq.s32.totalorder %s17, 0
    %p38 = por %p36, %p37
    %p39 = scmp.ne.s32.totalorder %s25, %s26
    %p40 = scmp.eq.s32.totalorder %s18, 3
    %p41 = por %p39, %p40
    %p43 = scmp.ne.s32.totalorder %s26, %s42
    %p44 = scmp.eq.s32.totalorder %s18, 0
    %p45 = por %p43, %p44
    %s47 = sadd.s32 %s46, 1
    %p50 = scmp.eq.s32.totalorder %s12, 3
    %p51 = scmp.ne.s32.totalorder %s46, %s48
    %p52 = scmp.eq.s32.totalorder %s12, 0
    %p53 = por %p51, %p52
    %p54 = scmp.ne.s32.totalorder %s46, %s48
    %p55 = scmp.eq.s32.totalorder %s17, 3
    %p56 = por %p54, %p55
    %p57 = scmp.ne.s32.totalorder %s48, %s49
    %p58 = scmp.eq.s32.totalorder %s17, 0
    %p59 = por %p57, %p58
    %p60 = scmp.ne.s32.totalorder %s48, %s49
    %p61 = scmp.eq.s32.totalorder %s18, 3
    %p62 = por %p60, %p61
    %p64 = scmp.ne.s32.totalorder %s49, %s63
    %p65 = scmp.eq.s32.totalorder %s18, 0
    %p66 = por %p64, %p65
    %s68 = sadd.s32 %s67, 1
    %p71 = scmp.eq.s32.totalorder %s12, 3
    %p72 = scmp.ne.s32.totalorder %s67, %s69
    %p73 = scmp.eq.s32.totalorder %s12, 0
    %p74 = por %p72, %p73
    %p75 = scmp.ne.s32.totalorder %s67, %s69
    %p76 = scmp.eq.s32.totalorder %s17, 3
    %p77 = por %p75, %p76
    %p78 = scmp.ne.s32.totalorder %s69, %s70
    %p79 = scmp.eq.s32.totalorder %s17, 0
    %p80 = por %p78, %p79
    %p81 = scmp.ne.s32.totalorder %s69, %s70
    %p82 = scmp.eq.s32.totalorder %s18, 3
    %p83 = por %p81, %p82
    %p85 = scmp.ne.s32.totalorder %s70, %s84
    %p86 = scmp.eq.s32.totalorder %s18, 0
    %p87 = por %p85, %p86
    %s89 = sadd.s32 %s88, 1
    %p92 = scmp.eq.s32.totalorder %s12, 3
    %p93 = scmp.ne.s32.totalorder %s88, %s90
    %p94 = scmp.eq.s32.totalorder %s12, 0
    %p95 = por %p93, %p94
    %p96 = scmp.ne.s32.totalorder %s88, %s90
    %p97 = scmp.eq.s32.totalorder %s17, 3
    %p98 = por %p96, %p97
    %p99 = scmp.ne.s32.totalorder %s90, %s91
    %p100 = scmp.eq.s32.totalorder %s17, 0
    %p101 = por %p99, %p100
    %p102 = scmp.ne.s32.totalorder %s90, %s91
    %p103 = scmp.eq.s32.totalorder %s18, 3
    %p104 = por %p102, %p103
    %p106 = scmp.ne.s32.totalorder %s91, %s105
    %p107 = scmp.eq.s32.totalorder %s18, 0
    %p108 = por %p106, %p107
    %s110 = sadd.s32 %s109, 1
    %p113 = scmp.eq.s32.totalorder %s12, 3
    %p114 = scmp.ne.s32.totalorder %s109, %s111
    %p115 = scmp.eq.s32.totalorder %s12, 0
    %p116 = por %p114, %p115
    %p117 = scmp.ne.s32.totalorder %s109, %s111
    %p118 = scmp.eq.s32.totalorder %s17, 3
    %p119 = por %p117, %p118
    %p120 = scmp.ne.s32.totalorder %s111, %s112
    %p121 = scmp.eq.s32.totalorder %s17, 0
    %p122 = por %p120, %p121
    %p123 = scmp.ne.s32.totalorder %s111, %s112
    %p124 = scmp.eq.s32.totalorder %s18, 3
    %p125 = por %p123, %p124
    %p127 = scmp.ne.s32.totalorder %s112, %s126
    %p128 = scmp.eq.s32.totalorder %s18, 0
    %p129 = por %p127, %p128
    %s131 = sadd.s32 %s130, 1
    %p134 = scmp.eq.s32.totalorder %s12, 3
    %p135 = scmp.ne.s32.totalorder %s130, %s132
    %p136 = scmp.eq.s32.totalorder %s12, 0
    %p137 = por %p135, %p136
    %p138 = scmp.ne.s32.totalorder %s130, %s132
    %p139 = scmp.eq.s32.totalorder %s17, 3
    %p140 = por %p138, %p139
    %p141 = scmp.ne.s32.totalorder %s132, %s133
    %p142 = scmp.eq.s32.totalorder %s17, 0
    %p143 = por %p141, %p142
    %p144 = scmp.ne.s32.totalorder %s132, %s133
    %p145 = scmp.eq.s32.totalorder %s18, 3
    %p146 = por %p144, %p145
    %p148 = scmp.ne.s32.totalorder %s133, %s147
    %p149 = scmp.eq.s32.totalorder %s18, 0
    %p150 = por %p148, %p149
    %s151 = ssub.s32 %s12, %s19
    %p152 = scmp.eq.s32.totalorder %s151, 0
    %s154 = sadd.s32 %s153, 1
    %s155 = scalar_select %p152, %s153, %s154
    %p158 = pneg %p152
    %p159 = scmp.eq.s32.totalorder %s12, 3
    %p160 = por %p158, %p159
    %p161 = scmp.ne.s32.totalorder %s153, %s156
    %p162 = scmp.eq.s32.totalorder %s12, 0
    %p163 = por %p161, %p162
    %p164 = scmp.ne.s32.totalorder %s153, %s156
    %p165 = scmp.eq.s32.totalorder %s17, 3
    %p166 = por %p164, %p165
    %p167 = scmp.ne.s32.totalorder %s156, %s157
    %p168 = scmp.eq.s32.totalorder %s17, 0
    %p169 = por %p167, %p168
    %p170 = scmp.ne.s32.totalorder %s156, %s157
    %p171 = scmp.eq.s32.totalorder %s18, 3
    %p172 = por %p170, %p171
    %p174 = scmp.ne.s32.totalorder %s157, %s173
    %p175 = scmp.eq.s32.totalorder %s18, 0
    %p176 = por %p174, %p175
    %p177 = scmp.le.s32.totalorder 1, %s12
    %p178 = scmp.lt.s32.totalorder %s12, 5
    %p179 = pnand %p177, %p178
    %p180 = pneg %p179
    // Predicated region
    $region9: #{tpu_custom_call.1} parent=5 // pred_check
      _
    $region10: #{tpu_custom_call.1} parent=5 // pred_check_branch
      %182 = sbr.rel (%p179) target = $region12
    $region11: #{tpu_custom_call.1} parent=5 // pred_region
      %s183 = ssub.s32 %s12, 1
      // Predicated region
      $region13: #{tpu_custom_call.1} parent=11 // pred_check
        %p184 = pneg %p59
      $region14: #{tpu_custom_call.1} parent=11 // pred_check_branch
        %186 = sbr.rel (%p184) target = $region16
      $region15: #{tpu_custom_call.1} parent=11 // pred_region
        _
      $region16: #{tpu_custom_call.1} parent=11 // pred_fallthru
        _
      // Predicated region
      $region17: #{tpu_custom_call.1} parent=11 // pred_check
        %p187 = pneg %p80
      $region18: #{tpu_custom_call.1} parent=11 // pred_check_branch
        %189 = sbr.rel (%p187) target = $region20
      $region19: #{tpu_custom_call.1} parent=11 // pred_region
        _
      $region20: #{tpu_custom_call.1} parent=11 // pred_fallthru
        _
      // Predicated region
      $region21: #{tpu_custom_call.1} parent=11 // pred_check
        %p190 = pneg %p101
      $region22: #{tpu_custom_call.1} parent=11 // pred_check_branch
        %192 = sbr.rel (%p190) target = $region24
      $region23: #{tpu_custom_call.1} parent=11 // pred_region
        _
      $region24: #{tpu_custom_call.1} parent=11 // pred_fallthru
        _
      // Predicated region
      $region25: #{tpu_custom_call.1} parent=11 // pred_check
        %p193 = pneg %p122
      $region26: #{tpu_custom_call.1} parent=11 // pred_check_branch
        %195 = sbr.rel (%p193) target = $region28
      $region27: #{tpu_custom_call.1} parent=11 // pred_region
        _
      $region28: #{tpu_custom_call.1} parent=11 // pred_fallthru
        _
      // Predicated region
      $region29: #{tpu_custom_call.1} parent=11 // pred_check
        %p196 = pneg %p143
      $region30: #{tpu_custom_call.1} parent=11 // pred_check_branch
        %198 = sbr.rel (%p196) target = $region32
      $region31: #{tpu_custom_call.1} parent=11 // pred_region
        _
      $region32: #{tpu_custom_call.1} parent=11 // pred_fallthru
        _
    $region12: #{tpu_custom_call.1} parent=5 // pred_fallthru
      _
    %p199 = scmp.lt.s32.totalorder %s12, 4
    // Predicated region
    $region33: #{tpu_custom_call.1} parent=5 // pred_check
      %p200 = pneg %p199
    $region34: #{tpu_custom_call.1} parent=5 // pred_check_branch
      %202 = sbr.rel (%p200) target = $region36
    $region35: #{tpu_custom_call.1} parent=5 // pred_region
      // Predicated region
      $region37: #{tpu_custom_call.1} parent=35 // pred_check
        %p203 = pneg %p32
      $region38: #{tpu_custom_call.1} parent=35 // pred_check_branch
        %205 = sbr.rel (%p203) target = $region40
      $region39: #{tpu_custom_call.1} parent=35 // pred_region
        %s206 = smul.u32 8, %s12
        %p207 = scmp.lt.s32.totalorder %s206, 31
        %s208 = scalar_select %p207, %s206, 31
        %s209 = smul.addr %s208, 8
        %s210 = scalar_lea.vmem %s0, %s209
        %s211 = smul.u32 8, %s12
      $region40: #{tpu_custom_call.1} parent=35 // pred_fallthru
        _
    $region36: #{tpu_custom_call.1} parent=5 // pred_fallthru
      _
    %p212 = scmp.le.s32.totalorder 1, %s12
    %p213 = scmp.lt.s32.totalorder %s12, 5
    %p214 = pnand %p212, %p213
    %p215 = pneg %p214
    // Predicated region
    $region41: #{tpu_custom_call.1} parent=5 // pred_check
      _
    $region42: #{tpu_custom_call.1} parent=5 // pred_check_branch
      %217 = sbr.rel (%p214) target = $region44
    $region43: #{tpu_custom_call.1} parent=5 // pred_region
      %s218 = ssub.s32 %s12, 1
      %s219 = smul.u32 8, %s17
      %p220 = scmp.lt.s32.totalorder %s219, 31
      %s221 = scalar_select %p220, %s219, 31
      %s222 = smul.addr %s221, 8
      %s223 = scalar_lea.vmem %s0, %s222
      %p224 = pneg %p38
      %p225 = pneg %p35
      %p226 = pneg %p59
      %p227 = pneg %p56
      %p228 = pneg %p80
      %p229 = pneg %p77
      %p230 = pneg %p101
      %p231 = pneg %p98
      %p232 = pneg %p122
      %p233 = pneg %p119
      %p234 = pneg %p143
      %p235 = pneg %p140
      %p236 = pneg %p169
      %p237 = pneg %p166
      %s238 = smul.u32 8, %s17
      %p239 = scmp.lt.s32.totalorder %s238, 31
      %s240 = scalar_select %p239, %s238, 31
      %s241 = smul.addr %s240, 8
      %s242 = scalar_lea.vmem %s6, %s241
      %s243 = smul.u32 8, %s17
      %p244 = scmp.lt.s32.totalorder %s243, 31
      %s245 = scalar_select %p244, %s243, 31
      %s246 = smul.addr %s245, 8
      %s247 = scalar_lea.vmem %s0, %s246
      %s248 = smul.u32 8, %s17
      %s249 = smul.u32 8, %s17
      %p250 = scmp.lt.s32.totalorder %s249, 31
      %s251 = scalar_select %p250, %s249, 31
      %s252 = smul.addr %s251, 8
      %s253 = scalar_lea.vmem %s6, %s252
      %s254 = smul.u32 8, %s17
      %v256 = vld [vmem:[%s247] sm:$0xff]
      %v257 = vld [vmem:[%s247 + $0x8] sm:$0xff]
      %v258 = vld [vmem:[%s247 + $0x10] sm:$0xff]
      %v259 = vld [vmem:[%s247 + $0x18] sm:$0xff]
      %v260 = vld [vmem:[%s247 + $0x20] sm:$0xff]
      %v261 = vld [vmem:[%s247 + $0x28] sm:$0xff]
      %v262 = vld [vmem:[%s247 + $0x30] sm:$0xff]
      %v263 = vld [vmem:[%s247 + $0x38] sm:$0xff]
      %v264 = vpack.c.bf16 %v257, %v256
      %v265 = vpack.c.bf16 %v259, %v258
      %v266 = vpack.c.bf16 %v261, %v260
      %v267 = vpack.c.bf16 %v263, %v262
      %v268 = vld [vmem:[%s1] sm:$0xf]
      %v269 = vld [vmem:[%s1 + $0x4] sm:$0xf]
      %v270 = vld [vmem:[%s1 + $0x8] sm:$0xf]
      %v271 = vld [vmem:[%s1 + $0xc] sm:$0xf]
      %v272 = vld [vmem:[%s5] sm:$0x1]
      %v273 = vlaneseq
      %v274 = vshrl.u32 %v273, 7
      %v275 = vsub.s32 0, %v274
      %v276 = vrot.slane %v272, %v275
      %v281 = vunpack.c.l.b16 %v268
      %v282 = vunpack.c.l.b16 %v269
      %v283 = vunpack.c.l.b16 %v270
      %v284 = vunpack.c.l.b16 %v271
      %v285 = vpack.c.b16 %v282, %v281
      %v286 = vpack.c.b16 %v284, %v283
      %vm289 = vcmask 261120
      %v291 = vsel %vm289, %v264, 0
      %v294 = vsel %vm289, %v265, 0
      %v297 = vsel %vm289, %v266, 0
      %v300 = vsel %vm289, %v267, 0
      %302 = vmatprep.subr.bf16.mxu0 0
      %303 = vmatpush1.bf16.msra.mxu0 %v285
      %304 = vmatprep.subr.bf16.mxu0 0
      %305 = vmatpush1.bf16.msra.mxu0 %v286
      %306 = vmatprep.subr.bf16.mxu0 0
      %307 = vmatpush1.bf16.msra.mxu0 0
      %308 = vmatprep.subr.bf16.mxu0 0
      %309 = vmatpush1.bf16.msra.mxu0 0
      %310 = vmatprep.subr.bf16.mxu0 0
      %311 = vmatpush1.bf16.msra.mxu0 0
      %312 = vmatprep.subr.bf16.mxu0 0
      %313 = vmatpush1.bf16.msra.mxu0 0
      %314 = vmatprep.subr.bf16.mxu0 0
      %315 = vmatpush1.bf16.msra.mxu0 0
      %316 = vmatprep.subr.bf16.mxu0 0
      %317 = vmatpush1.bf16.msra.mxu0 0
      %318 = vmatprep.subr.bf16.mxu0 0
      %319 = vmatpush1.bf16.msra.mxu0 0
      %320 = vmatprep.subr.bf16.mxu0 0
      %321 = vmatpush1.bf16.msra.mxu0 0
      %322 = vmatprep.subr.bf16.mxu0 0
      %323 = vmatpush1.bf16.msra.mxu0 0
      %324 = vmatprep.subr.bf16.mxu0 0
      %325 = vmatpush1.bf16.msra.mxu0 0
      %326 = vmatprep.subr.bf16.mxu0 0
      %327 = vmatpush1.bf16.msra.mxu0 0
      %328 = vmatprep.subr.bf16.mxu0 0
      %329 = vmatpush1.bf16.msra.mxu0 0
      %330 = vmatprep.subr.bf16.mxu0 0
      %331 = vmatpush1.bf16.msra.mxu0 0
      %332 = vmatprep.subr.bf16.mxu0 0
      %333 = vmatpush1.bf16.msra.mxu0 0
      %334 = vmatprep.mubr.bf16.mxu0 0
      %335 = vmatmul.mubr.bf16.gmra.mrb[0].mxu0 %v291
      %v336 = vpop.f32.mrb[0].mxu0
      %v337 = vadd.f32 %v276, %v336
      %v338 = vpop.f32.mrb[0].mxu0
      %v339 = vpop.f32.mrb[0].mxu0
      %v340 = vadd.f32 %v276, %v339
      %v341 = vpop.f32.mrb[0].mxu0
      %342 = vmatprep.mubr.bf16.mxu0 0
      %343 = vmatmul.mubr.bf16.gmra.mrb[0].mxu0 %v294
      %v344 = vpop.f32.mrb[0].mxu0
      %v345 = vadd.f32 %v276, %v344
      %v346 = vpop.f32.mrb[0].mxu0
      %v347 = vpop.f32.mrb[0].mxu0
      %v348 = vadd.f32 %v276, %v347
      %v349 = vpop.f32.mrb[0].mxu0
      %350 = vmatprep.mubr.bf16.mxu0 0
      %351 = vmatmul.mubr.bf16.gmra.mrb[0].mxu0 %v297
      %v352 = vpop.f32.mrb[0].mxu0
      %v353 = vadd.f32 %v276, %v352
      %v354 = vpop.f32.mrb[0].mxu0
      %v355 = vpop.f32.mrb[0].mxu0
      %v356 = vadd.f32 %v276, %v355
      %v357 = vpop.f32.mrb[0].mxu0
      %358 = vmatprep.mubr.bf16.mxu0 0
      %359 = vmatmul.mubr.bf16.gmra.mrb[0].mxu0 %v300
      %v360 = vpop.f32.mrb[0].mxu0
      %v361 = vadd.f32 %v276, %v360
      %v362 = vpop.f32.mrb[0].mxu0
      %v363 = vpop.f32.mrb[0].mxu0
      %v364 = vadd.f32 %v276, %v363
      %v365 = vpop.f32.mrb[0].mxu0
      %366 = vdwg.mxu0
      %v367 = vmax.f32 %v337, 0.0
      %v368 = vmax.f32 %v340, 0.0
      %v369 = vmax.f32 %v345, 0.0
      %v370 = vmax.f32 %v348, 0.0
      %v371 = vmax.f32 %v353, 0.0
      %v372 = vmax.f32 %v356, 0.0
      %v373 = vmax.f32 %v361, 0.0
      %v374 = vmax.f32 %v364, 0.0
      %v375 = vpack.c.bf16 %v368, %v367
      %v376 = vpack.c.bf16 %v370, %v369
      %v377 = vpack.c.bf16 %v372, %v371
      %v378 = vpack.c.bf16 %v374, %v373
      %v379 = vld [vmem:[%s2] sm:$0xf]
      %v380 = vld [vmem:[%s2 + $0x4] sm:$0xf]
      %v381 = vld [vmem:[%s2 + $0x8] sm:$0xf]
      %v382 = vld [vmem:[%s2 + $0xc] sm:$0xf]
      %v383 = vld [vmem:[%s2 + $0x10] sm:$0xf]
      %v384 = vld [vmem:[%s2 + $0x14] sm:$0xf]
      %v385 = vld [vmem:[%s2 + $0x18] sm:$0xf]
      %v386 = vld [vmem:[%s2 + $0x1c] sm:$0xf]
      %v387 = vld [vmem:[%s2 + $0x20] sm:$0xf]
      %v388 = vld [vmem:[%s2 + $0x24] sm:$0xf]
      %v389 = vld [vmem:[%s2 + $0x28] sm:$0xf]
      %v390 = vld [vmem:[%s2 + $0x2c] sm:$0xf]
      %v391 = vld [vmem:[%s2 + $0x30] sm:$0xf]
      %v392 = vld [vmem:[%s2 + $0x34] sm:$0xf]
      %v393 = vld [vmem:[%s2 + $0x38] sm:$0xf]
      %v394 = vld [vmem:[%s2 + $0x3c] sm:$0xf]
      %v395 = vld [vmem:[%s5 + $0x1] sm:$0x1]
      %v396 = vlaneseq
      %v397 = vshrl.u32 %v396, 7
      %v398 = vsub.s32 0, %v397
      %v399 = vrot.slane %v395, %v398
      %v416 = vunpack.c.l.b16 %v379
      %v417 = vunpack.c.l.b16 %v380
      %v418 = vunpack.c.l.b16 %v381
      %v419 = vunpack.c.l.b16 %v382
      %v420 = vunpack.c.l.b16 %v383
      %v421 = vunpack.c.l.b16 %v384
      %v422 = vunpack.c.l.b16 %v385
      %v423 = vunpack.c.l.b16 %v386
      %v424 = vunpack.c.l.b16 %v387
      %v425 = vunpack.c.l.b16 %v388
      %v426 = vunpack.c.l.b16 %v389
      %v427 = vunpack.c.l.b16 %v390
      %v428 = vunpack.c.l.b16 %v391
      %v429 = vunpack.c.l.b16 %v392
      %v430 = vunpack.c.l.b16 %v393
      %v431 = vunpack.c.l.b16 %v394
      %v432 = vpack.c.b16 %v417, %v416
      %v433 = vpack.c.b16 %v419, %v418
      %v434 = vpack.c.b16 %v421, %v420
      %v435 = vpack.c.b16 %v423, %v422
      %v436 = vpack.c.b16 %v425, %v424
      %v437 = vpack.c.b16 %v427, %v426
      %v438 = vpack.c.b16 %v429, %v428
      %v439 = vpack.c.b16 %v431, %v430
      %448 = vmatprep.subr.bf16.mxu0 0
      %449 = vmatpush1.bf16.msra.mxu0 %v432
      %450 = vmatprep.subr.bf16.mxu0 0
      %451 = vmatpush1.bf16.msra.mxu0 %v433
      %452 = vmatprep.subr.bf16.mxu0 0
      %453 = vmatpush1.bf16.msra.mxu0 %v434
      %454 = vmatprep.subr.bf16.mxu0 0
      %455 = vmatpush1.bf16.msra.mxu0 %v435
      %456 = vmatprep.subr.bf16.mxu0 0
      %457 = vmatpush1.bf16.msra.mxu0 %v436
      %458 = vmatprep.subr.bf16.mxu0 0
      %459 = vmatpush1.bf16.msra.mxu0 %v437
      %460 = vmatprep.subr.bf16.mxu0 0
      %461 = vmatpush1.bf16.msra.mxu0 %v438
      %462 = vmatprep.subr.bf16.mxu0 0
      %463 = vmatpush1.bf16.msra.mxu0 %v439
      %464 = vmatprep.subr.bf16.mxu0 0
      %465 = vmatpush1.bf16.msra.mxu0 0
      %466 = vmatprep.subr.bf16.mxu0 0
      %467 = vmatpush1.bf16.msra.mxu0 0
      %468 = vmatprep.subr.bf16.mxu0 0
      %469 = vmatpush1.bf16.msra.mxu0 0
      %470 = vmatprep.subr.bf16.mxu0 0
      %471 = vmatpush1.bf16.msra.mxu0 0
      %472 = vmatprep.subr.bf16.mxu0 0
      %473 = vmatpush1.bf16.msra.mxu0 0
      %474 = vmatprep.subr.bf16.mxu0 0
      %475 = vmatpush1.bf16.msra.mxu0 0
      %476 = vmatprep.subr.bf16.mxu0 0
      %477 = vmatpush1.bf16.msra.mxu0 0
      %478 = vmatprep.subr.bf16.mxu0 0
      %479 = vmatpush1.bf16.msra.mxu0 0
      %480 = vmatprep.mubr.bf16.mxu0 0
      %481 = vmatmul.mubr.bf16.gmra.mrb[0].mxu0 %v375
      %v482 = vpop.f32.mrb[0].mxu0
      %v483 = vadd.f32 %v399, %v482
      %v484 = vpop.f32.mrb[0].mxu0
      %v485 = vpop.f32.mrb[0].mxu0
      %v486 = vadd.f32 %v399, %v485
      %v487 = vpop.f32.mrb[0].mxu0
      %488 = vmatprep.mubr.bf16.mxu0 0
      %489 = vmatmul.mubr.bf16.gmra.mrb[0].mxu0 %v376
      %v490 = vpop.f32.mrb[0].mxu0
      %v491 = vadd.f32 %v399, %v490
      %v492 = vpop.f32.mrb[0].mxu0
      %v493 = vpop.f32.mrb[0].mxu0
      %v494 = vadd.f32 %v399, %v493
      %v495 = vpop.f32.mrb[0].mxu0
      %496 = vmatprep.mubr.bf16.mxu0 0
      %497 = vmatmul.mubr.bf16.gmra.mrb[0].mxu0 %v377
      %v498 = vpop.f32.mrb[0].mxu0
      %v499 = vadd.f32 %v399, %v498
      %v500 = vpop.f32.mrb[0].mxu0
      %v501 = vpop.f32.mrb[0].mxu0
      %v502 = vadd.f32 %v399, %v501
      %v503 = vpop.f32.mrb[0].mxu0
      %504 = vmatprep.mubr.bf16.mxu0 0
      %505 = vmatmul.mubr.bf16.gmra.mrb[0].mxu0 %v378
      %v506 = vpop.f32.mrb[0].mxu0
      %v507 = vadd.f32 %v399, %v506
      %v508 = vpop.f32.mrb[0].mxu0
      %v509 = vpop.f32.mrb[0].mxu0
      %v510 = vadd.f32 %v399, %v509
      %v511 = vpop.f32.mrb[0].mxu0
      %512 = vdwg.mxu0
      %v513 = vmax.f32 %v483, 0.0
      %v514 = vmax.f32 %v486, 0.0
      %v515 = vmax.f32 %v491, 0.0
      %v516 = vmax.f32 %v494, 0.0
      %v517 = vmax.f32 %v499, 0.0
      %v518 = vmax.f32 %v502, 0.0
      %v519 = vmax.f32 %v507, 0.0
      %v520 = vmax.f32 %v510, 0.0
      %v521 = vpack.c.bf16 %v514, %v513
      %v522 = vpack.c.bf16 %v516, %v515
      %v523 = vpack.c.bf16 %v518, %v517
      %v524 = vpack.c.bf16 %v520, %v519
      %v525 = vld [vmem:[%s3] sm:$0xf]
      %v526 = vld [vmem:[%s3 + $0x4] sm:$0xf]
      %v527 = vld [vmem:[%s3 + $0x8] sm:$0xf]
      %v528 = vld [vmem:[%s3 + $0xc] sm:$0xf]
      %v529 = vld [vmem:[%s3 + $0x10] sm:$0xf]
      %v530 = vld [vmem:[%s3 + $0x14] sm:$0xf]
      %v531 = vld [vmem:[%s3 + $0x18] sm:$0xf]
      %v532 = vld [vmem:[%s3 + $0x1c] sm:$0xf]
      %v533 = vld [vmem:[%s3 + $0x20] sm:$0xf]
      %v534 = vld [vmem:[%s3 + $0x24] sm:$0xf]
      %v535 = vld [vmem:[%s3 + $0x28] sm:$0xf]
      %v536 = vld [vmem:[%s3 + $0x2c] sm:$0xf]
      %v537 = vld [vmem:[%s3 + $0x30] sm:$0xf]
      %v538 = vld [vmem:[%s3 + $0x34] sm:$0xf]
      %v539 = vld [vmem:[%s3 + $0x38] sm:$0xf]
      %v540 = vld [vmem:[%s3 + $0x3c] sm:$0xf]
      %v541 = vld [vmem:[%s5 + $0x2] sm:$0x1]
      %v542 = vlaneseq
      %v543 = vshrl.u32 %v542, 7
      %v544 = vsub.s32 0, %v543
      %v545 = vrot.slane %v541, %v544
      %v562 = vunpack.c.l.b16 %v525
      %v563 = vunpack.c.l.b16 %v526
      %v564 = vunpack.c.l.b16 %v527
      %v565 = vunpack.c.l.b16 %v528
      %v566 = vunpack.c.l.b16 %v529
      %v567 = vunpack.c.l.b16 %v530
      %v568 = vunpack.c.l.b16 %v531
      %v569 = vunpack.c.l.b16 %v532
      %v570 = vunpack.c.l.b16 %v533
      %v571 = vunpack.c.l.b16 %v534
      %v572 = vunpack.c.l.b16 %v535
      %v573 = vunpack.c.l.b16 %v536
      %v574 = vunpack.c.l.b16 %v537
      %v575 = vunpack.c.l.b16 %v538
      %v576 = vunpack.c.l.b16 %v539
      %v577 = vunpack.c.l.b16 %v540
      %v578 = vpack.c.b16 %v563, %v562
      %v579 = vpack.c.b16 %v565, %v564
      %v580 = vpack.c.b16 %v567, %v566
      %v581 = vpack.c.b16 %v569, %v568
      %v582 = vpack.c.b16 %v571, %v570
      %v583 = vpack.c.b16 %v573, %v572
      %v584 = vpack.c.b16 %v575, %v574
      %v585 = vpack.c.b16 %v577, %v576
      %594 = vmatprep.subr.bf16.mxu0 0
      %595 = vmatpush1.bf16.msra.mxu0 %v578
      %596 = vmatprep.subr.bf16.mxu0 0
      %597 = vmatpush1.bf16.msra.mxu0 %v579
      %598 = vmatprep.subr.bf16.mxu0 0
      %599 = vmatpush1.bf16.msra.mxu0 %v580
      %600 = vmatprep.subr.bf16.mxu0 0
      %601 = vmatpush1.bf16.msra.mxu0 %v581
      %602 = vmatprep.subr.bf16.mxu0 0
      %603 = vmatpush1.bf16.msra.mxu0 %v582
      %604 = vmatprep.subr.bf16.mxu0 0
      %605 = vmatpush1.bf16.msra.mxu0 %v583
      %606 = vmatprep.subr.bf16.mxu0 0
      %607 = vmatpush1.bf16.msra.mxu0 %v584
      %608 = vmatprep.subr.bf16.mxu0 0
      %609 = vmatpush1.bf16.msra.mxu0 %v585
      %610 = vmatprep.subr.bf16.mxu0 0
      %611 = vmatpush1.bf16.msra.mxu0 0
      %612 = vmatprep.subr.bf16.mxu0 0
      %613 = vmatpush1.bf16.msra.mxu0 0
      %614 = vmatprep.subr.bf16.mxu0 0
      %615 = vmatpush1.bf16.msra.mxu0 0
      %616 = vmatprep.subr.bf16.mxu0 0
      %617 = vmatpush1.bf16.msra.mxu0 0
      %618 = vmatprep.subr.bf16.mxu0 0
      %619 = vmatpush1.bf16.msra.mxu0 0
      %620 = vmatprep.subr.bf16.mxu0 0
      %621 = vmatpush1.bf16.msra.mxu0 0
      %622 = vmatprep.subr.bf16.mxu0 0
      %623 = vmatpush1.bf16.msra.mxu0 0
      %624 = vmatprep.subr.bf16.mxu0 0
      %625 = vmatpush1.bf16.msra.mxu0 0
      %626 = vmatprep.mubr.bf16.mxu0 0
      %627 = vmatmul.mubr.bf16.gmra.mrb[0].mxu0 %v521
      %v628 = vpop.f32.mrb[0].mxu0
      %v629 = vadd.f32 %v545, %v628
      %v630 = vpop.f32.mrb[0].mxu0
      %v631 = vpop.f32.mrb[0].mxu0
      %v632 = vadd.f32 %v545, %v631
      %v633 = vpop.f32.mrb[0].mxu0
      %634 = vmatprep.mubr.bf16.mxu0 0
      %635 = vmatmul.mubr.bf16.gmra.mrb[0].mxu0 %v522
      %v636 = vpop.f32.mrb[0].mxu0
      %v637 = vadd.f32 %v545, %v636
      %v638 = vpop.f32.mrb[0].mxu0
      %v639 = vpop.f32.mrb[0].mxu0
      %v640 = vadd.f32 %v545, %v639
      %v641 = vpop.f32.mrb[0].mxu0
      %642 = vmatprep.mubr.bf16.mxu0 0
      %643 = vmatmul.mubr.bf16.gmra.mrb[0].mxu0 %v523
      %v644 = vpop.f32.mrb[0].mxu0
      %v645 = vadd.f32 %v545, %v644
      %v646 = vpop.f32.mrb[0].mxu0
      %v647 = vpop.f32.mrb[0].mxu0
      %v648 = vadd.f32 %v545, %v647
      %v649 = vpop.f32.mrb[0].mxu0
      %650 = vmatprep.mubr.bf16.mxu0 0
      %651 = vmatmul.mubr.bf16.gmra.mrb[0].mxu0 %v524
      %v652 = vpop.f32.mrb[0].mxu0
      %v653 = vadd.f32 %v545, %v652
      %v654 = vpop.f32.mrb[0].mxu0
      %v655 = vpop.f32.mrb[0].mxu0
      %v656 = vadd.f32 %v545, %v655
      %v657 = vpop.f32.mrb[0].mxu0
      %658 = vdwg.mxu0
      %v659 = vmax.f32 %v629, 0.0
      %v660 = vmax.f32 %v632, 0.0
      %v661 = vmax.f32 %v637, 0.0
      %v662 = vmax.f32 %v640, 0.0
      %v663 = vmax.f32 %v645, 0.0
      %v664 = vmax.f32 %v648, 0.0
      %v665 = vmax.f32 %v653, 0.0
      %v666 = vmax.f32 %v656, 0.0
      %v667 = vld [vmem:[%s4] sm:$0x1]
      %v669 = vlaneseq
      %v670 = vshrl.u32 %v669, 7
      %v671 = vsub.s32 0, %v670
      %v672 = vrot.slane %v667, %v671
      %v674 = vmul.f32 %v659, %v672
      %v675 = vmul.f32 %v660, %v672
      %v676 = vmul.f32 %v661, %v672
      %v677 = vmul.f32 %v662, %v672
      %v678 = vmul.f32 %v663, %v672
      %v679 = vmul.f32 %v664, %v672
      %v680 = vmul.f32 %v665, %v672
      %v681 = vmul.f32 %v666, %v672
      %682 = vadd.xlane.f32.xlu0 %v674
      %v683 = vpop.xlane.xlu0 %682
      %684 = vadd.xlane.f32.xlu0 %v675
      %v685 = vpop.xlane.xlu0 %684
      %686 = vadd.xlane.f32.xlu0 %v676
      %v687 = vpop.xlane.xlu0 %686
      %688 = vadd.xlane.f32.xlu0 %v677
      %v689 = vpop.xlane.xlu0 %688
      %690 = vadd.xlane.f32.xlu0 %v678
      %v691 = vpop.xlane.xlu0 %690
      %692 = vadd.xlane.f32.xlu0 %v679
      %v693 = vpop.xlane.xlu0 %692
      %694 = vadd.xlane.f32.xlu0 %v680
      %v695 = vpop.xlane.xlu0 %694
      %696 = vadd.xlane.f32.xlu0 %v681
      %v697 = vpop.xlane.xlu0 %696
      %v698 = vld [vmem:[%s5 + $0x3] sm:$0x1]
      %v699 = vlaneseq
      %v700 = vshrl.u32 %v699, 7
      %v701 = vsub.s32 0, %v700
      %v702 = vrot.slane %v698, %v701
      %v703 = vadd.f32 %v683, %v702
      %v704 = vadd.f32 %v685, %v702
      %v705 = vadd.f32 %v687, %v702
      %v706 = vadd.f32 %v689, %v702
      %v707 = vadd.f32 %v691, %v702
      %v708 = vadd.f32 %v693, %v702
      %v709 = vadd.f32 %v695, %v702
      %v710 = vadd.f32 %v697, %v702
      %v711 = vxor.u32 %v703, 2147483648
      %v712 = vxor.u32 %v704, 2147483648
      %v713 = vxor.u32 %v705, 2147483648
      %v714 = vxor.u32 %v706, 2147483648
      %v715 = vxor.u32 %v707, 2147483648
      %v716 = vxor.u32 %v708, 2147483648
      %v717 = vxor.u32 %v709, 2147483648
      %v718 = vxor.u32 %v710, 2147483648
      %v719 = vmul.f32 %v711, 1.442695
      %v720 = vpow.pop %v719
      %v721 = vmul.f32 %v712, 1.442695
      %v722 = vpow.pop %v721
      %v723 = vmul.f32 %v713, 1.442695
      %v724 = vpow.pop %v723
      %v725 = vmul.f32 %v714, 1.442695
      %v726 = vpow.pop %v725
      %v727 = vmul.f32 %v715, 1.442695
      %v728 = vpow.pop %v727
      %v729 = vmul.f32 %v716, 1.442695
      %v730 = vpow.pop %v729
      %v731 = vmul.f32 %v717, 1.442695
      %v732 = vpow.pop %v731
      %v733 = vmul.f32 %v718, 1.442695
      %v734 = vpow.pop %v733
      %v735 = vadd.f32 %v720, 1.0
      %v736 = vadd.f32 %v722, 1.0
      %v737 = vadd.f32 %v724, 1.0
      %v738 = vadd.f32 %v726, 1.0
      %v739 = vadd.f32 %v728, 1.0
      %v740 = vadd.f32 %v730, 1.0
      %v741 = vadd.f32 %v732, 1.0
      %v742 = vadd.f32 %v734, 1.0
      %v743 = vrcp.pop %v735
      %v744 = vmul.f32 1.0, %v743
      %v745 = vrcp.pop %v736
      %v746 = vmul.f32 1.0, %v745
      %v747 = vrcp.pop %v737
      %v748 = vmul.f32 1.0, %v747
      %v749 = vrcp.pop %v738
      %v750 = vmul.f32 1.0, %v749
      %v751 = vrcp.pop %v739
      %v752 = vmul.f32 1.0, %v751
      %v753 = vrcp.pop %v740
      %v754 = vmul.f32 1.0, %v753
      %v755 = vrcp.pop %v741
      %v756 = vmul.f32 1.0, %v755
      %v757 = vrcp.pop %v742
      %v758 = vmul.f32 1.0, %v757
      %vm759 = vcmask 7168
      %760 = vst.msk [vmem:[%s253] sm:$0xff] %vm759, %v744
      %761 = vst.msk [vmem:[%s253 + $0x8] sm:$0xff] %vm759, %v746
      %762 = vst.msk [vmem:[%s253 + $0x10] sm:$0xff] %vm759, %v748
      %763 = vst.msk [vmem:[%s253 + $0x18] sm:$0xff] %vm759, %v750
      %764 = vst.msk [vmem:[%s253 + $0x20] sm:$0xff] %vm759, %v752
      %765 = vst.msk [vmem:[%s253 + $0x28] sm:$0xff] %vm759, %v754
      %766 = vst.msk [vmem:[%s253 + $0x30] sm:$0xff] %vm759, %v756
      %767 = vst.msk [vmem:[%s253 + $0x38] sm:$0xff] %vm759, %v758
      %s768 = smul.u32 8, %s17
      %p769 = scmp.lt.s32.totalorder %s768, 31
      %s770 = scalar_select %p769, %s768, 31
      %s771 = smul.addr %s770, 8
      %s772 = scalar_lea.vmem %s6, %s771
      // Predicated region
      $region45: #{tpu_custom_call.1} parent=43 // pred_check
        %p773 = pneg %p166
      $region46: #{tpu_custom_call.1} parent=43 // pred_check_branch
        %775 = sbr.rel (%p773) target = $region48
      $region47: #{tpu_custom_call.1} parent=43 // pred_region
        %s776 = smul.u32 8, %s17
      $region48: #{tpu_custom_call.1} parent=43 // pred_fallthru
        _
    $region44: #{tpu_custom_call.1} parent=5 // pred_fallthru
      _
    %p777 = scmp.le.s32.totalorder 2, %s12
    // Predicated region
    $region49: #{tpu_custom_call.1} parent=5 // pred_check
      %p778 = pneg %p777
    $region50: #{tpu_custom_call.1} parent=5 // pred_check_branch
      %780 = sbr.rel (%p778) target = $region52
    $region51: #{tpu_custom_call.1} parent=5 // pred_region
      %s781 = ssub.s32 %s12, 2
      // Predicated region
      $region53: #{tpu_custom_call.1} parent=51 // pred_check
        %p782 = pneg %p172
      $region54: #{tpu_custom_call.1} parent=51 // pred_check_branch
        %784 = sbr.rel (%p782) target = $region56
      $region55: #{tpu_custom_call.1} parent=51 // pred_region
        %s785 = smul.u32 8, %s18
        %p786 = scmp.lt.s32.totalorder %s785, 31
        %s787 = scalar_select %p786, %s785, 31
        %s788 = smul.addr %s787, 8
        %s789 = scalar_lea.vmem %s6, %s788
      $region56: #{tpu_custom_call.1} parent=51 // pred_fallthru
        _
    $region52: #{tpu_custom_call.1} parent=5 // pred_fallthru
      _
  $region6: #{tpu_custom_call.1} parent=0 // loop_footer
    %s16 = sadd.s32 1, %s12
  $region7: #{tpu_custom_call.1} parent=0 // loop_footer_branch
    %11 = sbr.rel target = $region3
  $region8: #{tpu_custom_call.1} parent=0 // loop_exit
    _

</llo_original>
